<compile_context>
chip_gen: v5e
topology: v5e:2x2
jax: 0.10.0
libtpu: 0.0.40
codegen_flags: <defaults>
</compile_context>

<pallas_src>
import math

import jax
import jax.numpy as jnp
from jax.experimental import pallas as pl
from jax.experimental.pallas import tpu as pltpu


def _round_up(x, m):
    return ((x + m - 1) // m) * m


# ----------------------------------------------------------------------------
# Kernel 1: fused Linear_a / Linear_b + softplus + (a+b)  (MXU hot path).
# ----------------------------------------------------------------------------
def _linear_ab_kernel(x_ref, w_ref, bias_ref, a_ref, b_ref, ab_ref):
    x = x_ref[...]
    # Single MXU pass over x: columns [0:fout] -> a, [fout:2*fout] -> pre-softplus b.
    z = jnp.dot(x, w_ref[...], preferred_element_type=jnp.float32) + bias_ref[...]
    fout = a_ref.shape[-1]
    a = z[:, :fout]
    # F.softplus(z) = log(1 + exp(z)), numerically stable form.
    b = jnp.logaddexp(z[:, fout:], 0.0)
    a_ref[...] = a
    b_ref[...] = b
    ab_ref[...] = a + b


def linear_ab(x, w_cat, b_cat, *, fout, tb):
    """x: (n_pad, fin); w_cat: (fin, 2*fout); b_cat: (1, 2*fout). n_pad % tb == 0."""
    n, fin = x.shape
    f2 = w_cat.shape[1]
    out = jax.ShapeDtypeStruct((n, fout), jnp.float32)
    out_spec = pl.BlockSpec((tb, fout), lambda i: (i, 0))
    # TODO(synk): for large fin*fout (v7x: 64 MiB VMEM) add a K-reduction grid
    # axis with an f32 accumulator scratch instead of holding full weights.
    return pl.pallas_call(
        _linear_ab_kernel,
        out_shape=(out, out, out),
        grid_spec=pltpu.PrefetchScalarGridSpec(
            num_scalar_prefetch=0,
            grid=(n // tb,),
            in_specs=[
                pl.BlockSpec((tb, fin), lambda i: (i, 0)),
                pl.BlockSpec((fin, f2), lambda i: (0, 0)),
                pl.BlockSpec((1, f2), lambda i: (0, 0)),
            ],
            out_specs=[out_spec, out_spec, out_spec],
        ),
        compiler_params=pltpu.CompilerParams(dimension_semantics=("parallel",)),
    )(x, w_cat, b_cat)


# ----------------------------------------------------------------------------
# Kernel 2: elementwise pdf combination (streaming, EUP-lean formulation).
# ----------------------------------------------------------------------------
def _beta_pdf_kernel(x_ref, a_ref, b_ref, gab_ref, ga_ref, gb_ref, o_ref):
    x = x_ref[...]
    am1 = a_ref[...] - 1.0
    bm1 = b_ref[...] - 1.0
    # x**(a-1) * (1-x)**(b-1) == exp((a-1)*log(x) + (b-1)*log1p(-x)):
    # one exp + two logs instead of two power ops (2x exp + 2x log).
    num = gab_ref[...] * jnp.exp(am1 * jnp.log(x) + bm1 * jnp.log1p(-x))
    # Approximate EUP reciprocal replaces the full-precision divide.
    o_ref[...] = num * pl.reciprocal(ga_ref[...] + gb_ref[...], approx=True)


def beta_pdf(x, a, b, g_ab, g_a, g_b, *, tb):
    n, f = x.shape
    spec = pl.BlockSpec((tb, f), lambda i: (i, 0))
    return pl.pallas_call(
        _beta_pdf_kernel,
        out_shape=jax.ShapeDtypeStruct((n, f), jnp.float32),
        grid_spec=pltpu.PrefetchScalarGridSpec(
            num_scalar_prefetch=0,
            grid=(n // tb,),
            in_specs=[spec] * 6,
            out_specs=spec,
        ),
        compiler_params=pltpu.CompilerParams(dimension_semantics=("parallel",)),
    )(x, a, b, g_ab, g_a, g_b)


# ----------------------------------------------------------------------------
# Full forward pass.
# ----------------------------------------------------------------------------
def beta_sample_forward(x, wa, ba, wb, bb, key, *, tb_lin=256, tb_pdf=512):
    """x: (N, in_features); wa/wb: (out, in) PyTorch-layout; ba/bb: (out,)."""
    n, fin = x.shape
    fout = wa.shape[0]

    # Choose batch tiles: big tiles for real batches, shrink for small demos.
    tb_pdf = min(tb_pdf, _round_up(n, 8))
    tb_lin = min(tb_lin, tb_pdf)
    n_pad = _round_up(n, tb_pdf)
    if n_pad % tb_lin:
        tb_lin = tb_pdf

    # Pad the batch (tail rows are computed on a benign x=0.5 and sliced off),
    # so no rows are silently dropped when N is not a tile multiple.
    if n_pad != n:
        x_p = jnp.pad(x, ((0, n_pad - n), (0, 0)), constant_values=0.5)
    else:
        x_p = x

    # Fuse the two Linear layers into one (fin, 2*fout) weight / (1, 2*fout) bias.
    w_cat = jnp.concatenate([wa.T, wb.T], axis=1)
    b_cat = jnp.concatenate([ba, bb]).reshape(1, 2 * fout)

    a, b, ab = linear_ab(x_p, w_cat, b_cat, fout=fout, tb=tb_lin)

    # TODO(synk): torch._standard_gamma is a stochastic sampler with no Pallas
    # primitive; draw the gamma samples with jax.random.gamma in plain JAX glue.
    k1, k2, k3 = jax.random.split(key, 3)
    g_ab = jax.random.gamma(k1, ab)
    g_a = jax.random.gamma(k2, a)
    g_b = jax.random.gamma(k3, b)

    pdf = beta_pdf(x_p, a, b, g_ab, g_a, g_b, tb=tb_pdf)
    return pdf[:n]


if __name__ == "__main__":
    key = jax.random.PRNGKey(0)
    # Small demo shapes: in_features == out_features (broadcast requirement).
    # N=12 deliberately not a multiple of 8 to exercise the padded-tail path.
    N, FIN, FOUT = 12, 128, 128
    ks = jax.random.split(key, 6)

    bound = 1.0 / math.sqrt(FIN)  # PyTorch nn.Linear default init range
    wa = jax.random.uniform(ks[0], (FOUT, FIN), jnp.float32, -bound, bound)
    ba = jax.random.uniform(ks[1], (FOUT,), jnp.float32, -bound, bound)
    wb = jax.random.uniform(ks[2], (FOUT, FIN), jnp.float32, -bound, bound)
    bb = jax.random.uniform(ks[3], (FOUT,), jnp.float32, -bound, bound)

    # x in (0, 1): the Beta-pdf support (avoids trivially NaN powers).
    x = jax.random.uniform(ks[4], (N, FIN), jnp.float32, 0.01, 0.99)

    out = beta_sample_forward(x, wa, ba, wb, bb, ks[5])
    jax.block_until_ready(out)
    assert out.shape == (N, FOUT) and out.dtype == jnp.float32
    print("KERNEL_OK")
</pallas_src>

<mosaic_0001>
module attributes {stable_mosaic.version = 11 : i64} {
  func.func @_linear_ab_kernel(%arg0: i32, %arg1: memref<16x128xf32, #tpu.memory_space<vmem>>, %arg2: memref<128x256xf32, #tpu.memory_space<vmem>>, %arg3: memref<1x256xf32, #tpu.memory_space<vmem>>, %arg4: memref<16x128xf32, #tpu.memory_space<vmem>>, %arg5: memref<16x128xf32, #tpu.memory_space<vmem>>, %arg6: memref<16x128xf32, #tpu.memory_space<vmem>>) attributes {dimension_semantics = [#tpu.dimension_semantics<parallel>], iteration_bounds = array<i64: 1>, scalar_prefetch = 0 : i64, scratch_operands = 0 : i64, tpu.core_type = #tpu.core_type<tc>, window_params = [{transform_indices = @transform_0, window_bounds = array<i64: 16, 128>}, {pipeline_mode = #tpu.pipeline_mode<synchronous>, transform_indices = @transform_1, window_bounds = array<i64: 128, 256>}, {pipeline_mode = #tpu.pipeline_mode<synchronous>, transform_indices = @transform_2, window_bounds = array<i64: 1, 256>}, {transform_indices = @transform_3, window_bounds = array<i64: 16, 128>}, {transform_indices = @transform_4, window_bounds = array<i64: 16, 128>}, {transform_indices = @transform_5, window_bounds = array<i64: 16, 128>}]} {
    %c0 = arith.constant 0 : index
    %c0_0 = arith.constant 0 : index
    %0 = vector.load %arg1[%c0, %c0_0] : memref<16x128xf32, #tpu.memory_space<vmem>>, vector<16x128xf32>
    %c0_1 = arith.constant 0 : index
    %c0_2 = arith.constant 0 : index
    %1 = vector.load %arg2[%c0_1, %c0_2] : memref<128x256xf32, #tpu.memory_space<vmem>>, vector<128x256xf32>
    %cst = arith.constant dense<0.000000e+00> : vector<16x256xf32>
    %2 = tpu.matmul %0, %1, %cst {dimension_numbers = #tpu.dot_dimension_numbers<[1], [0], [0], [1], [0, 0, 1, 1], [], []>} : vector<16x128xf32>, vector<128x256xf32>, vector<16x256xf32> -> vector<16x256xf32>
    %c0_3 = arith.constant 0 : index
    %c0_4 = arith.constant 0 : index
    %3 = vector.load %arg3[%c0_3, %c0_4] : memref<1x256xf32, #tpu.memory_space<vmem>>, vector<1x256xf32>
    %4 = vector.broadcast %3 : vector<1x256xf32> to vector<16x256xf32>
    %5 = arith.addf %2, %4 : vector<16x256xf32>
    %6 = vector.extract_strided_slice %5 {offsets = [0, 0], sizes = [16, 128], strides = [1, 1]} : vector<16x256xf32> to vector<16x128xf32>
    %7 = vector.extract_strided_slice %5 {offsets = [0, 128], sizes = [16, 128], strides = [1, 1]} : vector<16x256xf32> to vector<16x128xf32>
    %cst_5 = arith.constant 0.000000e+00 : f32
    %8 = vector.broadcast %cst_5 : f32 to vector<16x128xf32>
    %9 = arith.maximumf %7, %8 : vector<16x128xf32>
    %10 = vector.broadcast %cst_5 : f32 to vector<16x128xf32>
    %11 = arith.subf %7, %10 : vector<16x128xf32>
    %12 = arith.cmpf one, %11, %11 : vector<16x128xf32>
    %13 = vector.broadcast %cst_5 : f32 to vector<16x128xf32>
    %14 = arith.addf %7, %13 : vector<16x128xf32>
    %15 = math.absf %11 : vector<16x128xf32>
    %cst_6 = arith.constant 0.000000e+00 : f32
    %16 = vector.broadcast %cst_6 : f32 to vector<16x128xf32>
    %17 = arith.subf %16, %15 : vector<16x128xf32>
    %18 = math.exp %17 : vector<16x128xf32>
    %19 = math.log1p %18 : vector<16x128xf32>
    %20 = arith.addf %9, %19 : vector<16x128xf32>
    %21 = arith.select %12, %14, %20 : vector<16x128xi1>, vector<16x128xf32>
    %c0_7 = arith.constant 0 : index
    %c0_8 = arith.constant 0 : index
    %22 = vector.load %arg4[%c0_7, %c0_8] : memref<16x128xf32, #tpu.memory_space<vmem>>, vector<16x128xf32>
    tpu.vector_store %arg4[%c0_7, %c0_8], %6 {strides = array<i32>} : memref<16x128xf32, #tpu.memory_space<vmem>>, vector<16x128xf32>,
    %c0_9 = arith.constant 0 : index
    %c0_10 = arith.constant 0 : index
    %23 = vector.load %arg5[%c0_9, %c0_10] : memref<16x128xf32, #tpu.memory_space<vmem>>, vector<16x128xf32>
    tpu.vector_store %arg5[%c0_9, %c0_10], %21 {strides = array<i32>} : memref<16x128xf32, #tpu.memory_space<vmem>>, vector<16x128xf32>,
    %24 = arith.addf %6, %21 : vector<16x128xf32>
    %c0_11 = arith.constant 0 : index
    %c0_12 = arith.constant 0 : index
    %25 = vector.load %arg6[%c0_11, %c0_12] : memref<16x128xf32, #tpu.memory_space<vmem>>, vector<16x128xf32>
    tpu.vector_store %arg6[%c0_11, %c0_12], %24 {strides = array<i32>} : memref<16x128xf32, #tpu.memory_space<vmem>>, vector<16x128xf32>,
    return
  }
  func.func @transform_0(%arg0: i32) -> (i32, i32) {
    %c0_i32 = arith.constant 0 : i32
    %c0_i32_0 = arith.constant 0 : i32
    return %arg0, %c0_i32 : i32, i32
  }
  func.func @transform_1(%arg0: i32) -> (i32, i32) {
    %c0_i32 = arith.constant 0 : i32
    %c0_i32_0 = arith.constant 0 : i32
    %c0_i32_1 = arith.constant 0 : i32
    return %c0_i32, %c0_i32_0 : i32, i32
  }
  func.func @transform_2(%arg0: i32) -> (i32, i32) {
    %c0_i32 = arith.constant 0 : i32
    %c0_i32_0 = arith.constant 0 : i32
    %c0_i32_1 = arith.constant 0 : i32
    return %c0_i32, %c0_i32_0 : i32, i32
  }
  func.func @transform_3(%arg0: i32) -> (i32, i32) {
    %c0_i32 = arith.constant 0 : i32
    %c0_i32_0 = arith.constant 0 : i32
    return %arg0, %c0_i32 : i32, i32
  }
  func.func @transform_4(%arg0: i32) -> (i32, i32) {
    %c0_i32 = arith.constant 0 : i32
    %c0_i32_0 = arith.constant 0 : i32
    return %arg0, %c0_i32 : i32, i32
  }
  func.func @transform_5(%arg0: i32) -> (i32, i32) {
    %c0_i32 = arith.constant 0 : i32
    %c0_i32_0 = arith.constant 0 : i32
    return %arg0, %c0_i32 : i32, i32
  }
}

</mosaic_0001>

<llo_original>
// kernel: tpu_custom_call.1
$region0: #{tpu_custom_call.1}
  #allocation0 [shape = 'u32[]', space=smem, size = 0x4, offset = 0x4, fixed_abs, tag = 'smem constant byte address 0x4 - core index']
  #allocation1 [shape = 'u32[72,128]{1,0:T(1,128)}', space=vmem, size = 0x9000, scoped, tag = 'internal scratch']
  %s0 = inlined_call_operand.hbm [shape: f32[16,128], index: 0, kind: input, shape index: {}]
  %s1 = inlined_call_operand.hbm [shape: f32[128,256], index: 1, kind: input, shape index: {}]
  %s2 = inlined_call_operand.hbm [shape: f32[1,256], index: 2, kind: input, shape index: {}]
  %s3 = inlined_call_operand.hbm [shape: f32[16,128], index: 3, kind: output, shape index: {0}]
  %s4 = inlined_call_operand.hbm [shape: f32[16,128], index: 4, kind: output, shape index: {1}]
  %s5 = inlined_call_operand.hbm [shape: f32[16,128], index: 5, kind: output, shape index: {2}]
  %6 = xla_tuple %s3, %s4, %s5
  %s7 = sld [smem:[#allocation0]]
  $region50: #{tpu_custom_call.1} parent=0
    _
  %s9 = ssub.s32 1, %s7
  %s10 = scalar_select 0, %s9, %s7
  $region1: #{tpu_custom_call.1} parent=0
    #allocation2 [shape = 'u8[8192]{0}', space=vmem, size = 0x2000, scoped, tag = 'input window, operand 0, single buffered']
    #allocation3 [shape = 's32[1]{0}', space=sflag, size = 0x4, scoped, tag = 'scoped memory for tpu_custom_call.1']
    #allocation4 [shape = 's32[1]{0}', space=sflag, size = 0x4, scoped, tag = 'scoped memory for tpu_custom_call.1']
    #allocation5 [shape = 'u8[131072]{0}', space=vmem, size = 0x20000, scoped, tag = 'input window, operand 1, single buffered']
    #allocation6 [shape = 's32[1]{0}', space=sflag, size = 0x4, scoped, tag = 'scoped memory for tpu_custom_call.1']
    #allocation7 [shape = 'u8[1024]{0}', space=vmem, size = 0x400, scoped, tag = 'input window, operand 2, single buffered']
    #allocation8 [shape = 'u8[8192]{0}', space=vmem, size = 0x2000, scoped, tag = 'output window, operand 0, single buffered']
    #allocation9 [shape = 'u8[8192]{0}', space=vmem, size = 0x2000, scoped, tag = 'output window, operand 1, single buffered']
    #allocation10 [shape = 's32[1]{0}', space=sflag, size = 0x4, scoped, tag = 'scoped memory for tpu_custom_call.1']
    #allocation11 [shape = 'u8[8192]{0}', space=vmem, size = 0x2000, scoped, tag = 'output window, operand 2, single buffered']
    %11 = vsyncpa [#allocation3], 0
    %12 = vsyncpa [#allocation6], 0
    %13 = vsyncpa [#allocation4], 0
    %14 = vsyncpa [#allocation10], 0
    // Predicated region
    $region2: #{tpu_custom_call.1} parent=1 // pred_check
      _
    $region3: #{tpu_custom_call.1} parent=1 // pred_check_branch
      %16 = sbr.rel (0) target = $region5
    $region4: #{tpu_custom_call.1} parent=1 // pred_region
      %18 = vsyncadd [#allocation3], 0
      %s19 = sshll.u32 %s0, 4
      %s20 = int_to_ptr.hbm [resolvable:$true] %s19
      %s21 = sshll.u32 [#allocation2], 4
      %s22 = int_to_ptr.vmem [resolvable:$true] %s21
      %27 = dma.hbm_to_vmem [thread:$0]  %s20, 256, %s22, [#allocation3], 128, 128, 8
    $region5: #{tpu_custom_call.1} parent=1 // pred_fallthru
      _
    // Predicated region
    $region6: #{tpu_custom_call.1} parent=1 // pred_check
      _
    $region7: #{tpu_custom_call.1} parent=1 // pred_check_branch
      %29 = sbr.rel (0) target = $region9
    $region8: #{tpu_custom_call.1} parent=1 // pred_region
      %31 = vsyncadd [#allocation6], 0
      %s32 = sshll.u32 %s1, 4
      %s33 = int_to_ptr.hbm [resolvable:$true] %s32
      %s34 = sshll.u32 [#allocation5], 4
      %s35 = int_to_ptr.vmem [resolvable:$true] %s34
      %40 = dma.hbm_to_vmem [thread:$0]  %s33, 4096, %s35, [#allocation6], 256, 256, 16
    $region9: #{tpu_custom_call.1} parent=1 // pred_fallthru
      _
    // Predicated region
    $region10: #{tpu_custom_call.1} parent=1 // pred_check
      _
    $region11: #{tpu_custom_call.1} parent=1 // pred_check_branch
      %42 = sbr.rel (0) target = $region13
    $region12: #{tpu_custom_call.1} parent=1 // pred_region
      %44 = vsyncadd [#allocation6], 0
      %s46 = sshll.u32 %s2, 4
      %s47 = int_to_ptr.hbm [resolvable:$true] %s46
      %s48 = sshll.u32 [#allocation7], 4
      %s49 = int_to_ptr.vmem [resolvable:$true] %s48
      %51 = dma.hbm_to_vmem [thread:$0]  %s47, 32, %s49, [#allocation6]
    $region13: #{tpu_custom_call.1} parent=1 // pred_fallthru
      _
    // Predicated region
    $region14: #{tpu_custom_call.1} parent=1 // pred_check
      _
    $region15: #{tpu_custom_call.1} parent=1 // pred_check_branch
      %53 = sbr.rel (0) target = $region17
    $region16: #{tpu_custom_call.1} parent=1 // pred_region
      %55 = dma.done [#allocation3], 256
    $region17: #{tpu_custom_call.1} parent=1 // pred_fallthru
      _
    // Predicated region
    $region18: #{tpu_custom_call.1} parent=1 // pred_check
      _
    $region19: #{tpu_custom_call.1} parent=1 // pred_check_branch
      %57 = sbr.rel (0) target = $region21
    $region20: #{tpu_custom_call.1} parent=1 // pred_region
      %59 = dma.done [#allocation6], 4096
    $region21: #{tpu_custom_call.1} parent=1 // pred_fallthru
      _
    // Predicated region
    $region22: #{tpu_custom_call.1} parent=1 // pred_check
      _
    $region23: #{tpu_custom_call.1} parent=1 // pred_check_branch
      %61 = sbr.rel (0) target = $region25
    $region24: #{tpu_custom_call.1} parent=1 // pred_region
      %63 = dma.done [#allocation6], 32
    $region25: #{tpu_custom_call.1} parent=1 // pred_fallthru
      _
    %v64 = vld [vmem:[#allocation2] sm:$0xff]
    %v65 = vld [vmem:[#allocation2 + $0x8] sm:$0xff]
    %v66 = vld [vmem:[#allocation5] sm:$0xff]
    %v67 = vld [vmem:[#allocation5 + $0x8] sm:$0xff]
    %v68 = vld [vmem:[#allocation5 + $0x10] sm:$0xff]
    %v69 = vld [vmem:[#allocation5 + $0x18] sm:$0xff]
    %v70 = vld [vmem:[#allocation5 + $0x20] sm:$0xff]
    %v71 = vld [vmem:[#allocation5 + $0x28] sm:$0xff]
    %v72 = vld [vmem:[#allocation5 + $0x30] sm:$0xff]
    %v73 = vld [vmem:[#allocation5 + $0x38] sm:$0xff]
    %v74 = vld [vmem:[#allocation5 + $0x40] sm:$0xff]
    %v75 = vld [vmem:[#allocation5 + $0x48] sm:$0xff]
    %v76 = vld [vmem:[#allocation5 + $0x50] sm:$0xff]
    %v77 = vld [vmem:[#allocation5 + $0x58] sm:$0xff]
    %v78 = vld [vmem:[#allocation5 + $0x60] sm:$0xff]
    %v79 = vld [vmem:[#allocation5 + $0x68] sm:$0xff]
    %v80 = vld [vmem:[#allocation5 + $0x70] sm:$0xff]
    %v81 = vld [vmem:[#allocation5 + $0x78] sm:$0xff]
    %v82 = vld [vmem:[#allocation5 + $0x80] sm:$0xff]
    %v83 = vld [vmem:[#allocation5 + $0x88] sm:$0xff]
    %v84 = vld [vmem:[#allocation5 + $0x90] sm:$0xff]
    %v85 = vld [vmem:[#allocation5 + $0x98] sm:$0xff]
    %v86 = vld [vmem:[#allocation5 + $0xa0] sm:$0xff]
    %v87 = vld [vmem:[#allocation5 + $0xa8] sm:$0xff]
    %v88 = vld [vmem:[#allocation5 + $0xb0] sm:$0xff]
    %v89 = vld [vmem:[#allocation5 + $0xb8] sm:$0xff]
    %v90 = vld [vmem:[#allocation5 + $0xc0] sm:$0xff]
    %v91 = vld [vmem:[#allocation5 + $0xc8] sm:$0xff]
    %v92 = vld [vmem:[#allocation5 + $0xd0] sm:$0xff]
    %v93 = vld [vmem:[#allocation5 + $0xd8] sm:$0xff]
    %v94 = vld [vmem:[#allocation5 + $0xe0] sm:$0xff]
    %v95 = vld [vmem:[#allocation5 + $0xe8] sm:$0xff]
    %v96 = vld [vmem:[#allocation5 + $0xf0] sm:$0xff]
    %v97 = vld [vmem:[#allocation5 + $0xf8] sm:$0xff]
    %v98 = vld [vmem:[#allocation7] sm:$0x3]
    %v100 = vperm.slane %v98, 0
    %v101 = vperm.slane %v98, 1
    %104 = vmatpush.msra.mxu0 %v96
    %105 = vmatpush.msra.mxu0 %v94
    %106 = vmatpush.msra.mxu0 %v92
    %107 = vmatpush.msra.mxu0 %v90
    %108 = vmatpush.msra.mxu0 %v88
    %109 = vmatpush.msra.mxu0 %v86
    %110 = vmatpush.msra.mxu0 %v84
    %111 = vmatpush.msra.mxu0 %v82
    %112 = vmatpush.msra.mxu0 %v80
    %113 = vmatpush.msra.mxu0 %v78
    %114 = vmatpush.msra.mxu0 %v76
    %115 = vmatpush.msra.mxu0 %v74
    %116 = vmatpush.msra.mxu0 %v72
    %117 = vmatpush.msra.mxu0 %v70
    %118 = vmatpush.msra.mxu0 %v68
    %119 = vmatpush.msra.mxu0 %v66
    %120 = vmatmul.f32.gmra.mxu0 %v64
    %v121 = vpop.f32.mrf.mxu0
    %v122 = vadd.f32 %v100, %v121
    %123 = vmatmul.f32.gmra.mxu0 %v65
    %v124 = vpop.f32.mrf.mxu0
    %v125 = vadd.f32 %v100, %v124
    %126 = vdwg.mxu0
    %127 = vmatpush.msra.mxu0 %v97
    %128 = vmatpush.msra.mxu0 %v95
    %129 = vmatpush.msra.mxu0 %v93
    %130 = vmatpush.msra.mxu0 %v91
    %131 = vmatpush.msra.mxu0 %v89
    %132 = vmatpush.msra.mxu0 %v87
    %133 = vmatpush.msra.mxu0 %v85
    %134 = vmatpush.msra.mxu0 %v83
    %135 = vmatpush.msra.mxu0 %v81
    %136 = vmatpush.msra.mxu0 %v79
    %137 = vmatpush.msra.mxu0 %v77
    %138 = vmatpush.msra.mxu0 %v75
    %139 = vmatpush.msra.mxu0 %v73
    %140 = vmatpush.msra.mxu0 %v71
    %141 = vmatpush.msra.mxu0 %v69
    %142 = vmatpush.msra.mxu0 %v67
    %143 = vmatmul.f32.gmra.mxu0 %v64
    %v144 = vpop.f32.mrf.mxu0
    %v145 = vadd.f32 %v101, %v144
    %146 = vmatmul.f32.gmra.mxu0 %v65
    %v147 = vpop.f32.mrf.mxu0
    %v148 = vadd.f32 %v101, %v147
    %149 = vdwg.mxu0
    %v150 = vmax.f32 %v145, 0.0
    %v151 = vmax.f32 %v148, 0.0
    %vm152 = vcmp.ne.f32.partialorder %v145, %v145
    %vm153 = vcmp.ne.f32.partialorder %v148, %v148
    %v154 = vadd.f32 %v145, 0.0
    %v155 = vadd.f32 %v148, 0.0
    %v156 = vand.u32 2147483647, %v145
    %v157 = vand.u32 2147483647, %v148
    %v158 = vsub.f32 0.0, %v156
    %v159 = vsub.f32 0.0, %v157
    %v160 = vmul.f32 %v158, 1.442695
    %v161 = vpow.pop %v160
    %v162 = vmul.f32 %v159, 1.442695
    %v163 = vpow.pop %v162
    %v164 = vadd.f32 %v161, 1.0
    %v165 = vlog2.pop %v164
    %v166 = vmul.f32 %v165, 0.6931472
    %v167 = vmul.f32 -0.5, %v161
    %v168 = vadd.f32 %v167, 1.0
    %v169 = vmul.f32 %v168, %v161
    %v170 = vand.u32 2147483647, %v161
    %vm171 = vcmp.lt.f32.partialorder %v170, 0.0004427343
    %v172 = vsel %vm171, %v169, %v166
    %v173 = vadd.f32 %v163, 1.0
    %v174 = vlog2.pop %v173
    %v175 = vmul.f32 %v174, 0.6931472
    %v176 = vmul.f32 -0.5, %v163
    %v177 = vadd.f32 %v176, 1.0
    %v178 = vmul.f32 %v177, %v163
    %v179 = vand.u32 2147483647, %v163
    %vm180 = vcmp.lt.f32.partialorder %v179, 0.0004427343
    %v181 = vsel %vm180, %v178, %v175
    %v182 = vadd.f32 %v150, %v172
    %v183 = vadd.f32 %v151, %v181
    %v184 = vsel %vm152, %v154, %v182
    %v185 = vsel %vm153, %v155, %v183
    %186 = vst [vmem:[#allocation8] sm:$0xff] %v122
    %187 = vst [vmem:[#allocation8 + $0x8] sm:$0xff] %v125
    %188 = vst [vmem:[#allocation9] sm:$0xff] %v184
    %189 = vst [vmem:[#allocation9 + $0x8] sm:$0xff] %v185
    %v190 = vadd.f32 %v122, %v184
    %v191 = vadd.f32 %v125, %v185
    %192 = vst [vmem:[#allocation11] sm:$0xff] %v190
    %193 = vst [vmem:[#allocation11 + $0x8] sm:$0xff] %v191
    // Predicated region
    $region26: #{tpu_custom_call.1} parent=1 // pred_check
      _
    $region27: #{tpu_custom_call.1} parent=1 // pred_check_branch
      %195 = sbr.rel (0) target = $region29
    $region28: #{tpu_custom_call.1} parent=1 // pred_region
      %197 = vsyncadd [#allocation4], 0
      %s198 = sshll.u32 [#allocation8], 4
      %s199 = int_to_ptr.vmem [resolvable:$true] %s198
      %s200 = sshll.u32 %s3, 4
      %s201 = int_to_ptr.hbm [resolvable:$true] %s200
      %206 = dma.vmem_to_hbm [thread:$0]  %s199, 256, %s201, [#allocation4], 128, 128, 8
    $region29: #{tpu_custom_call.1} parent=1 // pred_fallthru
      _
    // Predicated region
    $region30: #{tpu_custom_call.1} parent=1 // pred_check
      _
    $region31: #{tpu_custom_call.1} parent=1 // pred_check_branch
      %208 = sbr.rel (0) target = $region33
    $region32: #{tpu_custom_call.1} parent=1 // pred_region
      %210 = vsyncadd [#allocation10], 0
      %s211 = sshll.u32 [#allocation9], 4
      %s212 = int_to_ptr.vmem [resolvable:$true] %s211
      %s213 = sshll.u32 %s4, 4
      %s214 = int_to_ptr.hbm [resolvable:$true] %s213
      %219 = dma.vmem_to_hbm [thread:$0]  %s212, 256, %s214, [#allocation10], 128, 128, 8
    $region33: #{tpu_custom_call.1} parent=1 // pred_fallthru
      _
    // Predicated region
    $region34: #{tpu_custom_call.1} parent=1 // pred_check
      _
    $region35: #{tpu_custom_call.1} parent=1 // pred_check_branch
      %221 = sbr.rel (0) target = $region37
    $region36: #{tpu_custom_call.1} parent=1 // pred_region
      %223 = vsyncadd [#allocation10], 0
      %s224 = sshll.u32 [#allocation11], 4
      %s225 = int_to_ptr.vmem [resolvable:$true] %s224
      %s226 = sshll.u32 %s5, 4
      %s227 = int_to_ptr.hbm [resolvable:$true] %s226
      %232 = dma.vmem_to_hbm [thread:$0]  %s225, 256, %s227, [#allocation10], 128, 128, 8
    $region37: #{tpu_custom_call.1} parent=1 // pred_fallthru
      _
    // Predicated region
    $region38: #{tpu_custom_call.1} parent=1 // pred_check
      _
    $region39: #{tpu_custom_call.1} parent=1 // pred_check_branch
      %234 = sbr.rel (0) target = $region41
    $region40: #{tpu_custom_call.1} parent=1 // pred_region
      %236 = dma.done [#allocation4], 256
    $region41: #{tpu_custom_call.1} parent=1 // pred_fallthru
      _
    // Predicated region
    $region42: #{tpu_custom_call.1} parent=1 // pred_check
      _
    $region43: #{tpu_custom_call.1} parent=1 // pred_check_branch
      %238 = sbr.rel (0) target = $region45
    $region44: #{tpu_custom_call.1} parent=1 // pred_region
      %240 = dma.done [#allocation10], 256
    $region45: #{tpu_custom_call.1} parent=1 // pred_fallthru
      _
    // Predicated region
    $region46: #{tpu_custom_call.1} parent=1 // pred_check
      _
    $region47: #{tpu_custom_call.1} parent=1 // pred_check_branch
      %242 = sbr.rel (0) target = $region49
    $region48: #{tpu_custom_call.1} parent=1 // pred_region
      %244 = dma.done [#allocation10], 256
    $region49: #{tpu_custom_call.1} parent=1 // pred_fallthru
      _
    %245 = vsyncpa [#allocation3], 1
    %246 = vsyncpa [#allocation6], 1
    %247 = vsyncpa [#allocation4], 1
    %248 = vsyncpa [#allocation10], 1

</llo_original>
